<compile_context>
chip_gen: v6e
topology: v6e:2x2x1
jax: 0.10.0
libtpu: 0.0.40
codegen_flags: <defaults>
</compile_context>

<pallas_src>
import functools

import jax
import jax.numpy as jnp
from jax import lax
from jax.experimental import pallas as pl
from jax.experimental.pallas import tpu as pltpu


def _round_up(x, m):
    return ((x + m - 1) // m) * m


# ----------------------------------------------------------------------------
# Pallas kernel: one batch tile per grid step, per-partition scalar accumulator.
# ----------------------------------------------------------------------------
def _focal_loss_kernel(x_ref, t_ref, w_ref, out_ref, *,
                       alpha, gamma, inv_n, n_rows, block_rows, tiles_per_part):
    p = pl.program_id(0)      # partition (TensorCore) axis — "parallel"
    i = pl.program_id(1)      # batch-tile axis — "arbitrary" (reduction)

    @pl.when(i == 0)
    def _init():
        out_ref[...] = jnp.zeros_like(out_ref)

    x = x_ref[...].astype(jnp.float32)          # [TB, C] logits, upcast in-kernel
    t = t_ref[...]                              # [TB, 1] int32 targets
    w = w_ref[...].astype(jnp.float32)          # [1,  C] class weights (resident)

    # Numerically stable log-softmax along the class (lane) dimension.
    row_max = jnp.max(x, axis=-1, keepdims=True)
    z = x - row_max
    lse = jnp.log(jnp.sum(jnp.exp(z), axis=-1, keepdims=True))
    log_p = z - lse                             # [TB, C]

    # One-hot "gather" of the target class, fused with the class weight.
    # Rows past the true batch size (ragged last tile / clamped overflow tiles)
    # are masked via SELECT so garbage in those rows contributes exactly 0.
    cls = lax.broadcasted_iota(jnp.int32, x.shape, dimension=1)          # [TB, C]
    row = lax.broadcasted_iota(jnp.int32, (x.shape[0], 1), dimension=0)  # [TB, 1]
    row_start = (p * tiles_per_part + i) * block_rows
    valid = (row + row_start) < n_rows                                   # [TB, 1]
    mask = (cls == t) & valid                                            # [TB, C]

    ce = -jnp.sum(jnp.where(mask, log_p * w, 0.0), axis=-1, keepdims=True)  # [TB,1]
    pt = jnp.exp(-ce)
    one_minus_pt = 1.0 - pt
    if gamma == 0.0:
        modulator = jnp.ones_like(ce)
    else:
        # (1 - pt)^gamma via exp/log on the EUP, guarded so 1 - pt == 0 gives 0.
        modulator = jnp.where(
            one_minus_pt > 0.0,
            jnp.exp(gamma * jnp.log(jnp.maximum(one_minus_pt, 1e-37))),
            0.0,
        )
    focal = alpha * modulator * ce              # [TB, 1]; exactly 0 on masked rows

    # Pre-scale each tile's partial sum by 1/B before accumulating.
    out_ref[...] += inv_n * jnp.sum(focal, axis=(0, 1), keepdims=True)


# ----------------------------------------------------------------------------
# Wrapper: auto-size the batch tile, no input copies, call the kernel.
# ----------------------------------------------------------------------------
def focal_loss(inputs, targets, *, alpha=1.0, gamma=2.0, weight=None,
               block_bytes=2 * 1024 * 1024, max_block_rows=2048):
    b, c = inputs.shape

    if weight is None:
        weight = jnp.ones((c,), jnp.float32)
    weight = jnp.asarray(weight, jnp.float32).reshape(1, c)

    t = jnp.asarray(targets, jnp.int32).reshape(b, 1)

    # ---- batch tile from a VMEM byte budget (no wrapper pad / cast) ----
    itemsize = jnp.dtype(inputs.dtype).itemsize
    rows_by_budget = max(block_bytes // (c * itemsize), 8)
    tb = int(min(max_block_rows, rows_by_budget))
    tb = max(8, (tb // 8) * 8)
    if tb >= b:
        tb = b                       # single full-extent block (any B is legal)
        n_tiles = 1
    else:
        n_tiles = -(-b // tb)        # ragged last tile is masked in-kernel

    # ---- shard batch tiles over 2 TensorCores (v7x); serial loop elsewhere ----
    num_parts = 2 if n_tiles >= 2 else 1
    tiles_per_part = -(-n_tiles // num_parts)

    def tile_index(p, i):
        # Overflow (p, i) combos (when n_tiles % num_parts != 0) are clamped to
        # the last real tile; their rows are masked to 0 inside the kernel.
        return jnp.minimum(p * tiles_per_part + i, n_tiles - 1)

    x_spec = pl.BlockSpec((tb, c), lambda p, i: (tile_index(p, i), 0))
    t_spec = pl.BlockSpec((tb, 1), lambda p, i: (tile_index(p, i), 0))
    w_spec = pl.BlockSpec((1, c), lambda p, i: (0, 0))            # resident
    o_spec = pl.BlockSpec((1, 1, 1), lambda p, i: (p, 0, 0))      # resident acc

    # ---- explicit VMEM budget: double-buffered inputs + resident weight ----
    logits_blk = tb * c * itemsize
    targets_blk = tb * 128 * 4                      # (tb, 1) int32, lane-padded
    weight_blk = 8 * _round_up(c, 128) * 4
    vmem_need = 2 * (logits_blk + targets_blk) + weight_blk + 2 * (8 * 128 * 4)
    vmem_limit = int(min(max(vmem_need + (4 << 20), 16 << 20), 64 << 20))

    kernel = functools.partial(
        _focal_loss_kernel,
        alpha=float(alpha), gamma=float(gamma), inv_n=1.0 / float(b),
        n_rows=b, block_rows=tb, tiles_per_part=tiles_per_part,
    )

    partials = pl.pallas_call(
        kernel,
        out_shape=jax.ShapeDtypeStruct((num_parts, 1, 1), jnp.float32),
        grid=(num_parts, tiles_per_part),
        in_specs=[x_spec, t_spec, w_spec],
        out_specs=o_spec,
        compiler_params=pltpu.CompilerParams(
            dimension_semantics=("parallel", "arbitrary"),
            vmem_limit_bytes=vmem_limit,
        ),
    )(inputs, t, weight)

    return jnp.sum(partials)


# ----------------------------------------------------------------------------
# Pure-JAX reference for correctness checking.
# ----------------------------------------------------------------------------
def reference_focal_loss(inputs, targets, alpha=1.0, gamma=2.0, weight=None):
    logp = jax.nn.log_softmax(inputs.astype(jnp.float32), axis=-1)
    lp_t = jnp.take_along_axis(logp, targets[:, None].astype(jnp.int32), axis=-1)[:, 0]
    if weight is None:
        w_t = jnp.ones_like(lp_t)
    else:
        w_t = jnp.asarray(weight, jnp.float32)[targets]
    ce = -w_t * lp_t
    pt = jnp.exp(-ce)
    return jnp.mean(alpha * (1.0 - pt) ** gamma * ce)


if __name__ == "__main__":
    key = jax.random.PRNGKey(0)
    k_x, k_t, k_w, k_x2, k_t2 = jax.random.split(key, 5)

    # 1) default FocalLoss(alpha=1.0, gamma=2.0), small f32 problem
    batch, num_classes = 8, 16
    x = jax.random.normal(k_x, (batch, num_classes), jnp.float32)
    tgt = jax.random.randint(k_t, (batch,), 0, num_classes, jnp.int32)
    out = jax.jit(functools.partial(focal_loss, alpha=1.0, gamma=2.0))(x, tgt)
    jax.block_until_ready(out)
    ref = reference_focal_loss(x, tgt, alpha=1.0, gamma=2.0)
    assert jnp.allclose(out, ref, atol=1e-5, rtol=1e-5), (out, ref)

    # 2) class-weighted + alpha variant (exercises the `weight` argument)
    w = jax.random.uniform(k_w, (num_classes,), jnp.float32, 0.5, 1.5)
    out_w = jax.jit(functools.partial(focal_loss, alpha=0.5, gamma=2.0, weight=w))(x, tgt)
    jax.block_until_ready(out_w)
    ref_w = reference_focal_loss(x, tgt, alpha=0.5, gamma=2.0, weight=w)
    assert jnp.allclose(out_w, ref_w, atol=1e-5, rtol=1e-5), (out_w, ref_w)

    # 3) bf16 logits streamed in native dtype, ragged batch (70 % 16 != 0),
    #    multiple tiles + 2-partition grid (forced small tiles).
    batch2, classes2 = 70, 16
    x2 = jax.random.normal(k_x2, (batch2, classes2), jnp.float32).astype(jnp.bfloat16)
    t2 = jax.random.randint(k_t2, (batch2,), 0, classes2, jnp.int32)
    out2 = jax.jit(functools.partial(focal_loss, alpha=1.0, gamma=2.0,
                                     max_block_rows=16))(x2, t2)
    jax.block_until_ready(out2)
    ref2 = reference_focal_loss(x2, t2, alpha=1.0, gamma=2.0)
    assert jnp.allclose(out2, ref2, atol=1e-4, rtol=1e-4), (out2, ref2)

    # 4) tiny full-extent block path (batch < 8, classes < 128)
    x3 = jax.random.normal(k_x, (2, 4), jnp.float32)
    t3 = jax.random.randint(k_t, (2,), 0, 4, jnp.int32)
    out3 = jax.jit(focal_loss)(x3, t3)
    jax.block_until_ready(out3)
    ref3 = reference_focal_loss(x3, t3)
    assert jnp.allclose(out3, ref3, atol=1e-5, rtol=1e-5), (out3, ref3)

    print("KERNEL_OK")
</pallas_src>

<mosaic_0001>
module attributes {stable_mosaic.version = 11 : i64} {
  func.func @_focal_loss_kernel(%arg0: i32, %arg1: i32, %arg2: memref<8x16xf32, #tpu.memory_space<vmem>>, %arg3: memref<8x1xi32, #tpu.memory_space<vmem>>, %arg4: memref<1x16xf32, #tpu.memory_space<vmem>>, %arg5: memref<1x1x1xf32, #tpu.memory_space<vmem>>) attributes {dimension_semantics = [#tpu.dimension_semantics<parallel>, #tpu.dimension_semantics<arbitrary>], iteration_bounds = array<i64: 1, 1>, scalar_prefetch = 0 : i64, scratch_operands = 0 : i64, tpu.core_type = #tpu.core_type<tc>, window_params = [{transform_indices = @transform_0, window_bounds = array<i64: 8, 16>}, {transform_indices = @transform_1, window_bounds = array<i64: 8, 1>}, {pipeline_mode = #tpu.pipeline_mode<synchronous>, transform_indices = @transform_2, window_bounds = array<i64: 1, 16>}, {transform_indices = @transform_3, window_bounds = array<i64: 1, 1, 1>}]} {
    %c0_i32 = arith.constant 0 : i32
    %0 = arith.cmpi eq, %arg1, %c0_i32 : i32
    %1 = arith.extui %0 : i1 to i32
    %c0_i32_0 = arith.constant 0 : i32
    %2 = arith.cmpi ne, %1, %c0_i32_0 : i32
    scf.if %2 {
      %cst_26 = arith.constant 0.000000e+00 : f32
      %66 = vector.broadcast %cst_26 : f32 to vector<1x1x1xf32>
      %c0_27 = arith.constant 0 : index
      %c0_28 = arith.constant 0 : index
      %c0_29 = arith.constant 0 : index
      %67 = vector.load %arg5[%c0_27, %c0_28, %c0_29] : memref<1x1x1xf32, #tpu.memory_space<vmem>>, vector<1x1x1xf32>
      tpu.vector_store %arg5[%c0_27, %c0_28, %c0_29], %66 {strides = array<i32>} : memref<1x1x1xf32, #tpu.memory_space<vmem>>, vector<1x1x1xf32>,
    } else {
    }
    %c0 = arith.constant 0 : index
    %c0_1 = arith.constant 0 : index
    %3 = vector.load %arg2[%c0, %c0_1] : memref<8x16xf32, #tpu.memory_space<vmem>>, vector<8x16xf32>
    %c0_2 = arith.constant 0 : index
    %c0_3 = arith.constant 0 : index
    %4 = vector.load %arg3[%c0_2, %c0_3] : memref<8x1xi32, #tpu.memory_space<vmem>>, vector<8x1xi32>
    %c0_4 = arith.constant 0 : index
    %c0_5 = arith.constant 0 : index
    %5 = vector.load %arg4[%c0_4, %c0_5] : memref<1x16xf32, #tpu.memory_space<vmem>>, vector<1x16xf32>
    %cst = arith.constant dense<0xFF800000> : vector<8xf32>
    %6 = vector.multi_reduction <maximumf>, %3, %cst [1] : vector<8x16xf32> to vector<8xf32>
    %7 = vector.shape_cast %6 : vector<8xf32> to vector<8x1xf32>
    %8 = vector.broadcast %7 : vector<8x1xf32> to vector<8x16xf32>
    %9 = arith.subf %3, %8 : vector<8x16xf32>
    %10 = math.exp %9 : vector<8x16xf32>
    %cst_6 = arith.constant dense<0.000000e+00> : vector<8xf32>
    %11 = vector.multi_reduction <add>, %10, %cst_6 [1] : vector<8x16xf32> to vector<8xf32>
    %12 = vector.shape_cast %11 : vector<8xf32> to vector<8x1xf32>
    %13 = math.log %12 : vector<8x1xf32>
    %14 = vector.broadcast %13 : vector<8x1xf32> to vector<8x16xf32>
    %15 = arith.subf %9, %14 : vector<8x16xf32>
    %16 = tpu.iota {dimensions = array<i32: 1>} : vector<8x16xi32>
    %17 = tpu.iota {dimensions = array<i32: 0>} : vector<8x1xi32>
    %c1_i32 = arith.constant 1 : i32
    %18 = arith.muli %arg0, %c1_i32 : i32
    %19 = arith.addi %18, %arg1 : i32
    %c8_i32 = arith.constant 8 : i32
    %20 = arith.muli %19, %c8_i32 : i32
    %21 = vector.broadcast %20 : i32 to vector<8x1xi32>
    %22 = arith.addi %17, %21 : vector<8x1xi32>
    %c8_i32_7 = arith.constant 8 : i32
    %23 = vector.broadcast %c8_i32_7 : i32 to vector<8x1xi32>
    %24 = arith.cmpi slt, %22, %23 : vector<8x1xi32>
    %25 = vector.broadcast %4 : vector<8x1xi32> to vector<8x16xi32>
    %26 = arith.cmpi eq, %16, %25 : vector<8x16xi32>
    %27 = vector.broadcast %24 : vector<8x1xi1> to vector<8x16xi1>
    %28 = arith.andi %26, %27 : vector<8x16xi1>
    %29 = vector.broadcast %5 : vector<1x16xf32> to vector<8x16xf32>
    %30 = arith.mulf %15, %29 : vector<8x16xf32>
    %cst_8 = arith.constant 0.000000e+00 : f32
    %31 = vector.broadcast %cst_8 : f32 to vector<8x16xf32>
    %32 = arith.select %28, %30, %31 : vector<8x16xi1>, vector<8x16xf32>
    %cst_9 = arith.constant dense<0.000000e+00> : vector<8xf32>
    %33 = vector.multi_reduction <add>, %32, %cst_9 [1] : vector<8x16xf32> to vector<8xf32>
    %34 = vector.shape_cast %33 : vector<8xf32> to vector<8x1xf32>
    %cst_10 = arith.constant 0.000000e+00 : f32
    %35 = vector.broadcast %cst_10 : f32 to vector<8x1xf32>
    %36 = arith.subf %35, %34 : vector<8x1xf32>
    %cst_11 = arith.constant 0.000000e+00 : f32
    %37 = vector.broadcast %cst_11 : f32 to vector<8x1xf32>
    %38 = arith.subf %37, %36 : vector<8x1xf32>
    %39 = math.exp %38 : vector<8x1xf32>
    %cst_12 = arith.constant 1.000000e+00 : f32
    %40 = vector.broadcast %cst_12 : f32 to vector<8x1xf32>
    %41 = arith.subf %40, %39 : vector<8x1xf32>
    %cst_13 = arith.constant 0.000000e+00 : f32
    %42 = vector.broadcast %cst_13 : f32 to vector<8x1xf32>
    %43 = arith.cmpf ogt, %41, %42 : vector<8x1xf32>
    %cst_14 = arith.constant 9.99999991E-38 : f32
    %44 = vector.broadcast %cst_14 : f32 to vector<8x1xf32>
    %45 = arith.maximumf %41, %44 : vector<8x1xf32>
    %46 = math.log %45 : vector<8x1xf32>
    %cst_15 = arith.constant 2.000000e+00 : f32
    %47 = vector.broadcast %cst_15 : f32 to vector<8x1xf32>
    %48 = arith.mulf %47, %46 : vector<8x1xf32>
    %49 = math.exp %48 : vector<8x1xf32>
    %cst_16 = arith.constant 0.000000e+00 : f32
    %50 = vector.broadcast %cst_16 : f32 to vector<8x1xf32>
    %51 = arith.select %43, %49, %50 : vector<8x1xi1>, vector<8x1xf32>
    %cst_17 = arith.constant 1.000000e+00 : f32
    %52 = vector.broadcast %cst_17 : f32 to vector<8x1xf32>
    %53 = arith.mulf %52, %51 : vector<8x1xf32>
    %54 = arith.mulf %53, %36 : vector<8x1xf32>
    %c0_18 = arith.constant 0 : index
    %c0_19 = arith.constant 0 : index
    %c0_20 = arith.constant 0 : index
    %55 = vector.load %arg5[%c0_18, %c0_19, %c0_20] : memref<1x1x1xf32, #tpu.memory_space<vmem>>, vector<1x1x1xf32>
    %56 = vector.shape_cast %54 : vector<8x1xf32> to vector<1x8x1xf32>
    %cst_21 = arith.constant dense<0.000000e+00> : vector<1xf32>
    %57 = vector.multi_reduction <add>, %56, %cst_21 [1, 2] : vector<1x8x1xf32> to vector<1xf32>
    %58 = vector.shape_cast %57 : vector<1xf32> to vector<1x1x1xf32>
    %59 = vector.extract %58[0, 0, 0] : f32 from vector<1x1x1xf32>
    %60 = vector.broadcast %59 : f32 to vector<1x1xf32>
    %cst_22 = arith.constant 1.250000e-01 : f32
    %61 = vector.broadcast %cst_22 : f32 to vector<1x1xf32>
    %62 = arith.mulf %61, %60 : vector<1x1xf32>
    %63 = vector.shape_cast %62 : vector<1x1xf32> to vector<1x1x1xf32>
    %64 = arith.addf %55, %63 : vector<1x1x1xf32>
    %c0_23 = arith.constant 0 : index
    %c0_24 = arith.constant 0 : index
    %c0_25 = arith.constant 0 : index
    %65 = vector.load %arg5[%c0_23, %c0_24, %c0_25] : memref<1x1x1xf32, #tpu.memory_space<vmem>>, vector<1x1x1xf32>
    tpu.vector_store %arg5[%c0_23, %c0_24, %c0_25], %64 {strides = array<i32>} : memref<1x1x1xf32, #tpu.memory_space<vmem>>, vector<1x1x1xf32>,
    return
  }
  func.func @transform_0(%arg0: i32, %arg1: i32) -> (i32, i32) {
    %c1_i32 = arith.constant 1 : i32
    %0 = arith.muli %arg0, %c1_i32 : i32
    %1 = arith.addi %0, %arg1 : i32
    %c0_i32 = arith.constant 0 : i32
    %2 = arith.minsi %1, %c0_i32 : i32
    %c0_i32_0 = arith.constant 0 : i32
    %c0_i32_1 = arith.constant 0 : i32
    return %2, %c0_i32_0 : i32, i32
  }
  func.func @transform_1(%arg0: i32, %arg1: i32) -> (i32, i32) {
    %c1_i32 = arith.constant 1 : i32
    %0 = arith.muli %arg0, %c1_i32 : i32
    %1 = arith.addi %0, %arg1 : i32
    %c0_i32 = arith.constant 0 : i32
    %2 = arith.minsi %1, %c0_i32 : i32
    %c0_i32_0 = arith.constant 0 : i32
    %c0_i32_1 = arith.constant 0 : i32
    return %2, %c0_i32_0 : i32, i32
  }
  func.func @transform_2(%arg0: i32, %arg1: i32) -> (i32, i32) {
    %c0_i32 = arith.constant 0 : i32
    %c0_i32_0 = arith.constant 0 : i32
    %c0_i32_1 = arith.constant 0 : i32
    return %c0_i32, %c0_i32_0 : i32, i32
  }
  func.func @transform_3(%arg0: i32, %arg1: i32) -> (i32, i32, i32) {
    %c0_i32 = arith.constant 0 : i32
    %c0_i32_0 = arith.constant 0 : i32
    %c0_i32_1 = arith.constant 0 : i32
    return %arg0, %c0_i32, %c0_i32_0 : i32, i32, i32
  }
}

</mosaic_0001>

<llo_original>
// kernel: focal_loss.1
$region0: #{focal_loss.1}
  #allocation0 [shape = 'u32[]', space=smem, size = 0x4, offset = 0x4, fixed_abs, tag = 'smem constant byte address 0x4 - core index']
  #allocation1 [shape = 'u32[144,128]{1,0:T(1,128)}', space=vmem, size = 0x12000, scoped, tag = 'internal scratch']
  %s0 = inlined_call_operand.vmem [shape: f32[8,16], index: 0, kind: input, shape index: {}]
  %s1 = inlined_call_operand.vmem [shape: s32[8,1], index: 1, kind: input, shape index: {}]
  %s2 = inlined_call_operand.vmem [shape: f32[1,16], index: 2, kind: input, shape index: {}]
  %s3 = inlined_call_operand.hbm [shape: f32[1,1,1], index: 3, kind: output, shape index: {}]
  %s4 = sld [smem:[#allocation0]]
  $region26: #{focal_loss.1} parent=0
    _
  %s6 = ssub.s32 1, %s4
  %s7 = scalar_select 0, %s6, %s4
  $region1: #{focal_loss.1} parent=0
    #allocation2 [shape = 'u8[512]{0}', space=vmem, size = 0x400, scoped, tag = 'output window, operand 0, single buffered']
    #allocation3 [shape = 's32[1]{0}', space=sflag, size = 0x4, scoped, tag = 'scoped memory for focal_loss.1']
    %8 = vsyncpa [#allocation3], 0
    // Predicated region
    $region2: #{focal_loss.1} parent=1 // pred_check
      _
    $region3: #{focal_loss.1} parent=1 // pred_check_branch
      %10 = sbr.rel (0) target = $region5
    $region4: #{focal_loss.1} parent=1 // pred_region
      %s11 = sadd.s32 0, 0
      %p12 = scmp.lt.s32.totalorder %s11, 0
      %s13 = scalar_select %p12, %s11, 0
      %p14 = scmp.lt.s32.totalorder %s13, 0
      %s15 = scalar_select %p14, %s13, 0
      %s16 = smul.addr %s15, 8
      %s17 = scalar_lea.vmem %s0, %s16
      %s18 = sadd.s32 0, 0
      %p19 = scmp.lt.s32.totalorder %s18, 0
      %s20 = scalar_select %p19, %s18, 0
    $region5: #{focal_loss.1} parent=1 // pred_fallthru
      _
    // Predicated region
    $region6: #{focal_loss.1} parent=1 // pred_check
      _
    $region7: #{focal_loss.1} parent=1 // pred_check_branch
      %22 = sbr.rel (0) target = $region9
    $region8: #{focal_loss.1} parent=1 // pred_region
      %s23 = sadd.s32 0, 0
      %p24 = scmp.lt.s32.totalorder %s23, 0
      %s25 = scalar_select %p24, %s23, 0
      %p26 = scmp.lt.s32.totalorder %s25, 0
      %s27 = scalar_select %p26, %s25, 0
      %s28 = smul.addr %s27, 8
      %s29 = scalar_lea.vmem %s1, %s28
      %s30 = sadd.s32 0, 0
      %p31 = scmp.lt.s32.totalorder %s30, 0
      %s32 = scalar_select %p31, %s30, 0
    $region9: #{focal_loss.1} parent=1 // pred_fallthru
      _
    // Predicated region
    $region10: #{focal_loss.1} parent=1 // pred_check
      _
    $region11: #{focal_loss.1} parent=1 // pred_check_branch
      %34 = sbr.rel (0) target = $region13
    $region12: #{focal_loss.1} parent=1 // pred_region
      _
    $region13: #{focal_loss.1} parent=1 // pred_fallthru
      _
    %s35 = sadd.s32 0, 0
    %p36 = scmp.lt.s32.totalorder %s35, 0
    %s37 = scalar_select %p36, %s35, 0
    %p38 = scmp.lt.s32.totalorder %s37, 0
    %s39 = scalar_select %p38, %s37, 0
    %s40 = smul.addr %s39, 8
    %s41 = scalar_lea.vmem %s0, %s40
    %s42 = sadd.s32 0, 0
    %p43 = scmp.lt.s32.totalorder %s42, 0
    %s44 = scalar_select %p43, %s42, 0
    %p45 = scmp.lt.s32.totalorder %s44, 0
    %s46 = scalar_select %p45, %s44, 0
    %s47 = smul.addr %s46, 8
    %s48 = scalar_lea.vmem %s1, %s47
    %s49 = sadd.s32 0, 0
    %p50 = scmp.lt.s32.totalorder %s49, 0
    %s51 = scalar_select %p50, %s49, 0
    %p52 = scmp.lt.s32.totalorder %s51, 0
    %s53 = scalar_select %p52, %s51, 0
    %s54 = smul.addr %s53, 8
    %s55 = scalar_lea.vmem %s0, %s54
    %s56 = sadd.s32 0, 0
    %p57 = scmp.lt.s32.totalorder %s56, 0
    %s58 = scalar_select %p57, %s56, 0
    %s59 = sadd.s32 0, 0
    %p60 = scmp.lt.s32.totalorder %s59, 0
    %s61 = scalar_select %p60, %s59, 0
    %p62 = scmp.lt.s32.totalorder %s61, 0
    %s63 = scalar_select %p62, %s61, 0
    %s64 = smul.addr %s63, 8
    %s65 = scalar_lea.vmem %s1, %s64
    %s66 = sadd.s32 0, 0
    %p67 = scmp.lt.s32.totalorder %s66, 0
    %s68 = scalar_select %p67, %s66, 0
    %p69 = scmp.eq.s32.totalorder 0, 0
    // Predicated region
    $region14: #{focal_loss.1} parent=1 // pred_check
      %p70 = pneg %p69
    $region15: #{focal_loss.1} parent=1 // pred_check_branch
      %72 = sbr.rel (%p70) target = $region17
    $region16: #{focal_loss.1} parent=1 // pred_region
      %vm73 = vcmask 0
      %74 = vst.msk [vmem:[#allocation2] sm:$0x1] %vm73, 0.0
    $region17: #{focal_loss.1} parent=1 // pred_fallthru
      _
    %v75 = vld [vmem:[%s55] sm:$0xff]
    %v76 = vld [vmem:[%s65] sm:$0xff]
    %v77 = vld [vmem:[%s2] sm:$0x1]
    %vm78 = vcmask 130048
    %v79 = vsel %vm78, %v75, -inf
    %80 = vmax.xlane.f32.xlu0 %v79
    %v81 = vpop.xlane.xlu0 %80
    %v82 = vsub.f32 %v75, %v81
    %v83 = vmul.f32 %v82, 1.442695
    %v84 = vpow.pop %v83
    %v85 = vsel %vm78, %v84, 0.0
    %86 = vadd.xlane.f32.xlu0 %v85
    %v87 = vpop.xlane.xlu0 %86
    %v88 = vlog2.pop %v87
    %v89 = vmul.f32 %v88, 0.6931472
    %v90 = vsub.f32 %v82, %v89
    %v91 = vlaneseq
    %v92 = vand.u32 %v91, 127
    %v93 = vlaneseq
    %v94 = vshrl.u32 %v93, 7
    %s95 = sadd.s32 0, 0
    %s96 = smul.u32 %s95, 8
    %v97 = vstv %s96
    %v98 = vadd.s32 %v94, %v97
    %vm99 = vcmp.lt.s32.totalorder %v98, 8
    %100 = vset.pattern.permute.xlu0 0
    %101 = vperm.xlu0 %100, %v76
    %v102 = vpop.permute.xlu0 %101
    %vm103 = vcmp.eq.s32.totalorder %v92, %v102
    %v104 = vsel %vm99, 1, 0
    %vm105 = vcmp.eq.s32.totalorder %v104, 1
    %vm106 = vmand %vm103, %vm105
    %v108 = vlaneseq
    %v109 = vshrl.u32 %v108, 7
    %v110 = vsub.s32 0, %v109
    %v111 = vrot.slane %v77, %v110
    %v113 = vmul.f32 %v90, %v111
    %v114 = vsel %vm106, %v113, 0.0
    %v115 = vsel %vm78, %v114, 0.0
    %116 = vadd.xlane.f32.xlu0 %v115
    %v117 = vpop.xlane.xlu0 %116
    %v118 = vsub.f32 0.0, %v117
    %v119 = vsub.f32 0.0, %v118
    %v120 = vmul.f32 %v119, 1.442695
    %v121 = vpow.pop %v120
    %v122 = vsub.f32 1.0, %v121
    %vm123 = vcmp.gt.f32.partialorder %v122, 0.0
    %v124 = vmax.f32 %v122, 1e-37
    %v125 = vlog2.pop %v124
    %v126 = vmul.f32 %v125, 0.6931472
    %v127 = vmul.f32 %v126, 2.0
    %v128 = vmul.f32 %v127, 1.442695
    %v129 = vpow.pop %v128
    %v130 = vsel %vm123, %v129, 0.0
    %v131 = vmul.f32 %v130, %v118
    %v132 = vld [vmem:[#allocation2] sm:$0x1]
    %vm133 = vcmask 7168
    %v134 = vsel %vm133, %v131, 0.0
    %135 = vadd.xlane.f32.xlu0 %v134
    %v136 = vpop.xlane.xlu0 %135
    %v137 = vrot.slane %v136, 4
    %v138 = vadd.f32 %v136, %v137
    %v139 = vrot.slane %v138, 2
    %v140 = vadd.f32 %v138, %v139
    %v141 = vrot.slane %v140, 1
    %v142 = vadd.f32 %v140, %v141
    %s143 = vtos %v142
    %v144 = vstv %s143
    %v145 = vmul.f32 %v144, 0.125
    %v146 = vadd.f32 %v132, %v145
    %vm147 = vcmask 0
    %148 = vst.msk [vmem:[#allocation2] sm:$0x1] %vm147, %v146
    // Predicated region
    $region18: #{focal_loss.1} parent=1 // pred_check
      _
    $region19: #{focal_loss.1} parent=1 // pred_check_branch
      %150 = sbr.rel (0) target = $region21
    $region20: #{focal_loss.1} parent=1 // pred_region
      %s152 = ssub.s32 16, 16
      %153 = vsyncadd [#allocation3], %s152
      %s155 = sshll.u32 [#allocation2], 4
      %s156 = int_to_ptr.vmem [resolvable:$true] %s155
      %158 = dma.vmem_to_hbm [thread:$0]  %s156, 16, %s3, [#allocation3]
    $region21: #{focal_loss.1} parent=1 // pred_fallthru
      _
    // Predicated region
    $region22: #{focal_loss.1} parent=1 // pred_check
      _
    $region23: #{focal_loss.1} parent=1 // pred_check_branch
      %160 = sbr.rel (0) target = $region25
    $region24: #{focal_loss.1} parent=1 // pred_region
      %161 = dma.done [#allocation3], 16
    $region25: #{focal_loss.1} parent=1 // pred_fallthru
      _
    %162 = vsyncpa [#allocation3], 1

</llo_original>
